<compile_context>
chip_gen: v7x
topology: tpu7x:2x2x1
jax: 0.10.0
libtpu: 0.0.40
codegen_flags: <defaults>
</compile_context>

<pallas_src>
import jax
import jax.numpy as jnp
from jax.experimental import pallas as pl
from jax.experimental.pallas import tpu as pltpu

HIDDEN = 10            # lin1 output features
SUB_TILE = 8           # sublanes per batch block (vreg sublane count)
LANE_TILE = 1024       # lanes per batch block (multiple of 128)
BLOCK = SUB_TILE * LANE_TILE   # samples per grid step (8192)

# SMEM parameter layout: 10 groups of [w1[j,0], w1[j,1], b1[j], w2[0,j]] followed by b2.
_N_PARAMS = 4 * HIDDEN + 1     # 41 f32 scalars


def simplenet_kernel(params_ref, theta_ref, noise_ref, out_ref):
    # params_ref : SMEM (41,) f32 scalars
    # theta/noise/out refs : VMEM (SUB_TILE, LANE_TILE) f32, one sample per element
    x0 = jnp.tanh(0.5 * theta_ref[...])        # == 2*sigmoid(theta) - 1 (exact identity)
    x1 = 2.0 * noise_ref[...] - 1.0            # (8, 1024)

    acc = jnp.zeros(out_ref.shape, jnp.float32)
    # Unrolled loop over the 10 real hidden units; scalar weights broadcast from SMEM.
    for j in range(HIDDEN):
        w10 = params_ref[4 * j + 0]
        w11 = params_ref[4 * j + 1]
        b1j = params_ref[4 * j + 2]
        w2j = params_ref[4 * j + 3]
        h = jnp.tanh(w10 * x0 + w11 * x1 + b1j)
        acc = acc + w2j * h

    out_ref[...] = acc + params_ref[4 * HIDDEN]   # + b2, dense (8, 1024) store


def pack_params(w1, b1, w2, b2):
    """Pack lin1/lin2 parameters once into a flat (41,) f32 vector for SMEM."""
    groups = jnp.stack(
        [w1[:, 0], w1[:, 1], b1, w2[0, :]], axis=1).astype(jnp.float32)     # (10, 4)
    return jnp.concatenate([groups.reshape(-1), b2.reshape(1).astype(jnp.float32)])


@jax.jit
def simplenet_forward_batched(theta, noise, params):
    """theta, noise: (B,) independent samples; params: (41,) packed. Returns (B,)."""
    B = theta.shape[0]
    theta = theta.astype(jnp.float32)
    noise = noise.astype(jnp.float32)

    n_steps = pl.cdiv(B, BLOCK)
    Bp = n_steps * BLOCK
    if Bp != B:                                    # trace-time check: pad only ragged tails
        theta = jnp.pad(theta, (0, Bp - B))
        noise = jnp.pad(noise, (0, Bp - B))

    th2 = theta.reshape(n_steps * SUB_TILE, LANE_TILE)
    nz2 = noise.reshape(n_steps * SUB_TILE, LANE_TILE)

    out = pl.pallas_call(
        simplenet_kernel,
        out_shape=jax.ShapeDtypeStruct((n_steps * SUB_TILE, LANE_TILE), jnp.float32),
        grid=(n_steps,),
        in_specs=[
            pl.BlockSpec(memory_space=pltpu.MemorySpace.SMEM),        # params: whole array
            pl.BlockSpec((SUB_TILE, LANE_TILE), lambda i: (i, 0)),    # theta slab
            pl.BlockSpec((SUB_TILE, LANE_TILE), lambda i: (i, 0)),    # noise slab
        ],
        out_specs=pl.BlockSpec((SUB_TILE, LANE_TILE), lambda i: (i, 0)),
        compiler_params=pltpu.CompilerParams(
            dimension_semantics=("parallel",)),    # v7x: shard batch tiles over 2 TCs
    )(params, th2, nz2)
    return out.reshape(Bp)[:B]


@jax.jit
def simplenet_forward_single(theta, noise, w1, b1, w2, b2):
    """Original module call convention (theta, noise of shape (1,)) -> plain jnp.

    A pallas_call dispatch for one sample (~11 transcendentals) is pure overhead, so the
    B=1 path does not go through the kernel.
    """
    x = 2.0 * jnp.concatenate([jax.nn.sigmoid(theta), noise]) - 1.0   # (2,)
    h = jnp.tanh(w1 @ x + b1)                                         # (10,)
    return w2 @ h + b2                                                # (1,)


def _reference(theta, noise, w1, b1, w2, b2):
    """Pure-JAX reference of the PyTorch forward, vectorized over the batch."""
    x = 2.0 * jnp.stack([jax.nn.sigmoid(theta), noise], axis=-1) - 1.0   # (B, 2)
    h = jnp.tanh(x @ w1.T + b1)                                          # (B, 10)
    return (h @ w2.T + b2)[:, 0]                                         # (B,)


if __name__ == "__main__":
    key = jax.random.PRNGKey(0)
    k_theta, k_noise, k_w1, k_w2 = jax.random.split(key, 4)

    # Deterministic parameter init matching __init__: xavier_uniform weights, zero biases.
    a1 = (6.0 / (2 + 10)) ** 0.5
    a2 = (6.0 / (10 + 1)) ** 0.5
    w1 = jax.random.uniform(k_w1, (10, 2), jnp.float32, minval=-a1, maxval=a1)
    w2 = jax.random.uniform(k_w2, (1, 10), jnp.float32, minval=-a2, maxval=a2)
    b1 = jnp.zeros((10,), jnp.float32)
    b2 = jnp.zeros((1,), jnp.float32)

    # Pack parameters ONCE (hoisted out of the per-call path).
    params = pack_params(w1, b1, w2, b2)

    # Tile-aligned batch: two grid steps (>=2 parallel steps for v7x), no padding copy.
    B = 2 * BLOCK
    theta_b = jax.random.normal(k_theta, (B,), dtype=jnp.float32)
    noise_b = jax.random.normal(k_noise, (B,), dtype=jnp.float32)

    y_b = simplenet_forward_batched(theta_b, noise_b, params)
    jax.block_until_ready(y_b)
    y_ref = _reference(theta_b, noise_b, w1, b1, w2, b2)
    assert jnp.allclose(y_b, y_ref, atol=1e-5, rtol=1e-5), (y_b[:4], y_ref[:4])

    # Ragged batch: exercises the pad-only-the-tail path.
    Br = BLOCK + 37
    y_r = simplenet_forward_batched(theta_b[:Br], noise_b[:Br], params)
    jax.block_until_ready(y_r)
    assert jnp.allclose(y_r, y_ref[:Br], atol=1e-5, rtol=1e-5), (y_r[:4], y_ref[:4])

    # Original single-sample module signature (plain jnp, no pallas dispatch).
    y1 = simplenet_forward_single(theta_b[:1], noise_b[:1], w1, b1, w2, b2)
    jax.block_until_ready(y1)
    assert jnp.allclose(y1, y_ref[:1], atol=1e-5, rtol=1e-5), (y1, y_ref[:1])

    print("KERNEL_OK")
</pallas_src>

<mosaic_0001>
module attributes {stable_mosaic.version = 11 : i64} {
  func.func @simplenet_kernel(%arg0: i32, %arg1: memref<41xf32, #tpu.memory_space<smem>>, %arg2: memref<8x1024xf32, #tpu.memory_space<vmem>>, %arg3: memref<8x1024xf32, #tpu.memory_space<vmem>>, %arg4: memref<8x1024xf32, #tpu.memory_space<vmem>>) attributes {dimension_semantics = [#tpu.dimension_semantics<parallel>], iteration_bounds = array<i64: 2>, scalar_prefetch = 0 : i64, scratch_operands = 0 : i64, tpu.core_type = #tpu.core_type<tc>, window_params = [{transform_indices = @transform_0, window_bounds = array<i64: 41>}, {transform_indices = @transform_1, window_bounds = array<i64: 8, 1024>}, {transform_indices = @transform_2, window_bounds = array<i64: 8, 1024>}, {transform_indices = @transform_3, window_bounds = array<i64: 8, 1024>}]} {
    %c0 = arith.constant 0 : index
    %c0_0 = arith.constant 0 : index
    %0 = vector.load %arg2[%c0, %c0_0] : memref<8x1024xf32, #tpu.memory_space<vmem>>, vector<8x1024xf32>
    %cst = arith.constant 5.000000e-01 : f32
    %1 = vector.broadcast %cst : f32 to vector<8x1024xf32>
    %2 = arith.mulf %1, %0 : vector<8x1024xf32>
    %3 = math.tanh %2 : vector<8x1024xf32>
    %c0_1 = arith.constant 0 : index
    %c0_2 = arith.constant 0 : index
    %4 = vector.load %arg3[%c0_1, %c0_2] : memref<8x1024xf32, #tpu.memory_space<vmem>>, vector<8x1024xf32>
    %cst_3 = arith.constant 2.000000e+00 : f32
    %5 = vector.broadcast %cst_3 : f32 to vector<8x1024xf32>
    %6 = arith.mulf %5, %4 : vector<8x1024xf32>
    %cst_4 = arith.constant 1.000000e+00 : f32
    %7 = vector.broadcast %cst_4 : f32 to vector<8x1024xf32>
    %8 = arith.subf %6, %7 : vector<8x1024xf32>
    %cst_5 = arith.constant 0.000000e+00 : f32
    %9 = vector.broadcast %cst_5 : f32 to vector<8x1024xf32>
    %c0_6 = arith.constant 0 : index
    %10 = memref.load %arg1[%c0_6] : memref<41xf32, #tpu.memory_space<smem>>
    %c1 = arith.constant 1 : index
    %11 = memref.load %arg1[%c1] : memref<41xf32, #tpu.memory_space<smem>>
    %c2 = arith.constant 2 : index
    %12 = memref.load %arg1[%c2] : memref<41xf32, #tpu.memory_space<smem>>
    %c3 = arith.constant 3 : index
    %13 = memref.load %arg1[%c3] : memref<41xf32, #tpu.memory_space<smem>>
    %14 = vector.broadcast %10 : f32 to vector<8x1024xf32>
    %15 = arith.mulf %14, %3 : vector<8x1024xf32>
    %16 = vector.broadcast %11 : f32 to vector<8x1024xf32>
    %17 = arith.mulf %16, %8 : vector<8x1024xf32>
    %18 = arith.addf %15, %17 : vector<8x1024xf32>
    %19 = vector.broadcast %12 : f32 to vector<8x1024xf32>
    %20 = arith.addf %18, %19 : vector<8x1024xf32>
    %21 = math.tanh %20 : vector<8x1024xf32>
    %22 = vector.broadcast %13 : f32 to vector<8x1024xf32>
    %23 = arith.mulf %22, %21 : vector<8x1024xf32>
    %24 = arith.addf %9, %23 : vector<8x1024xf32>
    %c4 = arith.constant 4 : index
    %25 = memref.load %arg1[%c4] : memref<41xf32, #tpu.memory_space<smem>>
    %c5 = arith.constant 5 : index
    %26 = memref.load %arg1[%c5] : memref<41xf32, #tpu.memory_space<smem>>
    %c6 = arith.constant 6 : index
    %27 = memref.load %arg1[%c6] : memref<41xf32, #tpu.memory_space<smem>>
    %c7 = arith.constant 7 : index
    %28 = memref.load %arg1[%c7] : memref<41xf32, #tpu.memory_space<smem>>
    %29 = vector.broadcast %25 : f32 to vector<8x1024xf32>
    %30 = arith.mulf %29, %3 : vector<8x1024xf32>
    %31 = vector.broadcast %26 : f32 to vector<8x1024xf32>
    %32 = arith.mulf %31, %8 : vector<8x1024xf32>
    %33 = arith.addf %30, %32 : vector<8x1024xf32>
    %34 = vector.broadcast %27 : f32 to vector<8x1024xf32>
    %35 = arith.addf %33, %34 : vector<8x1024xf32>
    %36 = math.tanh %35 : vector<8x1024xf32>
    %37 = vector.broadcast %28 : f32 to vector<8x1024xf32>
    %38 = arith.mulf %37, %36 : vector<8x1024xf32>
    %39 = arith.addf %24, %38 : vector<8x1024xf32>
    %c8 = arith.constant 8 : index
    %40 = memref.load %arg1[%c8] : memref<41xf32, #tpu.memory_space<smem>>
    %c9 = arith.constant 9 : index
    %41 = memref.load %arg1[%c9] : memref<41xf32, #tpu.memory_space<smem>>
    %c10 = arith.constant 10 : index
    %42 = memref.load %arg1[%c10] : memref<41xf32, #tpu.memory_space<smem>>
    %c11 = arith.constant 11 : index
    %43 = memref.load %arg1[%c11] : memref<41xf32, #tpu.memory_space<smem>>
    %44 = vector.broadcast %40 : f32 to vector<8x1024xf32>
    %45 = arith.mulf %44, %3 : vector<8x1024xf32>
    %46 = vector.broadcast %41 : f32 to vector<8x1024xf32>
    %47 = arith.mulf %46, %8 : vector<8x1024xf32>
    %48 = arith.addf %45, %47 : vector<8x1024xf32>
    %49 = vector.broadcast %42 : f32 to vector<8x1024xf32>
    %50 = arith.addf %48, %49 : vector<8x1024xf32>
    %51 = math.tanh %50 : vector<8x1024xf32>
    %52 = vector.broadcast %43 : f32 to vector<8x1024xf32>
    %53 = arith.mulf %52, %51 : vector<8x1024xf32>
    %54 = arith.addf %39, %53 : vector<8x1024xf32>
    %c12 = arith.constant 12 : index
    %55 = memref.load %arg1[%c12] : memref<41xf32, #tpu.memory_space<smem>>
    %c13 = arith.constant 13 : index
    %56 = memref.load %arg1[%c13] : memref<41xf32, #tpu.memory_space<smem>>
    %c14 = arith.constant 14 : index
    %57 = memref.load %arg1[%c14] : memref<41xf32, #tpu.memory_space<smem>>
    %c15 = arith.constant 15 : index
    %58 = memref.load %arg1[%c15] : memref<41xf32, #tpu.memory_space<smem>>
    %59 = vector.broadcast %55 : f32 to vector<8x1024xf32>
    %60 = arith.mulf %59, %3 : vector<8x1024xf32>
    %61 = vector.broadcast %56 : f32 to vector<8x1024xf32>
    %62 = arith.mulf %61, %8 : vector<8x1024xf32>
    %63 = arith.addf %60, %62 : vector<8x1024xf32>
    %64 = vector.broadcast %57 : f32 to vector<8x1024xf32>
    %65 = arith.addf %63, %64 : vector<8x1024xf32>
    %66 = math.tanh %65 : vector<8x1024xf32>
    %67 = vector.broadcast %58 : f32 to vector<8x1024xf32>
    %68 = arith.mulf %67, %66 : vector<8x1024xf32>
    %69 = arith.addf %54, %68 : vector<8x1024xf32>
    %c16 = arith.constant 16 : index
    %70 = memref.load %arg1[%c16] : memref<41xf32, #tpu.memory_space<smem>>
    %c17 = arith.constant 17 : index
    %71 = memref.load %arg1[%c17] : memref<41xf32, #tpu.memory_space<smem>>
    %c18 = arith.constant 18 : index
    %72 = memref.load %arg1[%c18] : memref<41xf32, #tpu.memory_space<smem>>
    %c19 = arith.constant 19 : index
    %73 = memref.load %arg1[%c19] : memref<41xf32, #tpu.memory_space<smem>>
    %74 = vector.broadcast %70 : f32 to vector<8x1024xf32>
    %75 = arith.mulf %74, %3 : vector<8x1024xf32>
    %76 = vector.broadcast %71 : f32 to vector<8x1024xf32>
    %77 = arith.mulf %76, %8 : vector<8x1024xf32>
    %78 = arith.addf %75, %77 : vector<8x1024xf32>
    %79 = vector.broadcast %72 : f32 to vector<8x1024xf32>
    %80 = arith.addf %78, %79 : vector<8x1024xf32>
    %81 = math.tanh %80 : vector<8x1024xf32>
    %82 = vector.broadcast %73 : f32 to vector<8x1024xf32>
    %83 = arith.mulf %82, %81 : vector<8x1024xf32>
    %84 = arith.addf %69, %83 : vector<8x1024xf32>
    %c20 = arith.constant 20 : index
    %85 = memref.load %arg1[%c20] : memref<41xf32, #tpu.memory_space<smem>>
    %c21 = arith.constant 21 : index
    %86 = memref.load %arg1[%c21] : memref<41xf32, #tpu.memory_space<smem>>
    %c22 = arith.constant 22 : index
    %87 = memref.load %arg1[%c22] : memref<41xf32, #tpu.memory_space<smem>>
    %c23 = arith.constant 23 : index
    %88 = memref.load %arg1[%c23] : memref<41xf32, #tpu.memory_space<smem>>
    %89 = vector.broadcast %85 : f32 to vector<8x1024xf32>
    %90 = arith.mulf %89, %3 : vector<8x1024xf32>
    %91 = vector.broadcast %86 : f32 to vector<8x1024xf32>
    %92 = arith.mulf %91, %8 : vector<8x1024xf32>
    %93 = arith.addf %90, %92 : vector<8x1024xf32>
    %94 = vector.broadcast %87 : f32 to vector<8x1024xf32>
    %95 = arith.addf %93, %94 : vector<8x1024xf32>
    %96 = math.tanh %95 : vector<8x1024xf32>
    %97 = vector.broadcast %88 : f32 to vector<8x1024xf32>
    %98 = arith.mulf %97, %96 : vector<8x1024xf32>
    %99 = arith.addf %84, %98 : vector<8x1024xf32>
    %c24 = arith.constant 24 : index
    %100 = memref.load %arg1[%c24] : memref<41xf32, #tpu.memory_space<smem>>
    %c25 = arith.constant 25 : index
    %101 = memref.load %arg1[%c25] : memref<41xf32, #tpu.memory_space<smem>>
    %c26 = arith.constant 26 : index
    %102 = memref.load %arg1[%c26] : memref<41xf32, #tpu.memory_space<smem>>
    %c27 = arith.constant 27 : index
    %103 = memref.load %arg1[%c27] : memref<41xf32, #tpu.memory_space<smem>>
    %104 = vector.broadcast %100 : f32 to vector<8x1024xf32>
    %105 = arith.mulf %104, %3 : vector<8x1024xf32>
    %106 = vector.broadcast %101 : f32 to vector<8x1024xf32>
    %107 = arith.mulf %106, %8 : vector<8x1024xf32>
    %108 = arith.addf %105, %107 : vector<8x1024xf32>
    %109 = vector.broadcast %102 : f32 to vector<8x1024xf32>
    %110 = arith.addf %108, %109 : vector<8x1024xf32>
    %111 = math.tanh %110 : vector<8x1024xf32>
    %112 = vector.broadcast %103 : f32 to vector<8x1024xf32>
    %113 = arith.mulf %112, %111 : vector<8x1024xf32>
    %114 = arith.addf %99, %113 : vector<8x1024xf32>
    %c28 = arith.constant 28 : index
    %115 = memref.load %arg1[%c28] : memref<41xf32, #tpu.memory_space<smem>>
    %c29 = arith.constant 29 : index
    %116 = memref.load %arg1[%c29] : memref<41xf32, #tpu.memory_space<smem>>
    %c30 = arith.constant 30 : index
    %117 = memref.load %arg1[%c30] : memref<41xf32, #tpu.memory_space<smem>>
    %c31 = arith.constant 31 : index
    %118 = memref.load %arg1[%c31] : memref<41xf32, #tpu.memory_space<smem>>
    %119 = vector.broadcast %115 : f32 to vector<8x1024xf32>
    %120 = arith.mulf %119, %3 : vector<8x1024xf32>
    %121 = vector.broadcast %116 : f32 to vector<8x1024xf32>
    %122 = arith.mulf %121, %8 : vector<8x1024xf32>
    %123 = arith.addf %120, %122 : vector<8x1024xf32>
    %124 = vector.broadcast %117 : f32 to vector<8x1024xf32>
    %125 = arith.addf %123, %124 : vector<8x1024xf32>
    %126 = math.tanh %125 : vector<8x1024xf32>
    %127 = vector.broadcast %118 : f32 to vector<8x1024xf32>
    %128 = arith.mulf %127, %126 : vector<8x1024xf32>
    %129 = arith.addf %114, %128 : vector<8x1024xf32>
    %c32 = arith.constant 32 : index
    %130 = memref.load %arg1[%c32] : memref<41xf32, #tpu.memory_space<smem>>
    %c33 = arith.constant 33 : index
    %131 = memref.load %arg1[%c33] : memref<41xf32, #tpu.memory_space<smem>>
    %c34 = arith.constant 34 : index
    %132 = memref.load %arg1[%c34] : memref<41xf32, #tpu.memory_space<smem>>
    %c35 = arith.constant 35 : index
    %133 = memref.load %arg1[%c35] : memref<41xf32, #tpu.memory_space<smem>>
    %134 = vector.broadcast %130 : f32 to vector<8x1024xf32>
    %135 = arith.mulf %134, %3 : vector<8x1024xf32>
    %136 = vector.broadcast %131 : f32 to vector<8x1024xf32>
    %137 = arith.mulf %136, %8 : vector<8x1024xf32>
    %138 = arith.addf %135, %137 : vector<8x1024xf32>
    %139 = vector.broadcast %132 : f32 to vector<8x1024xf32>
    %140 = arith.addf %138, %139 : vector<8x1024xf32>
    %141 = math.tanh %140 : vector<8x1024xf32>
    %142 = vector.broadcast %133 : f32 to vector<8x1024xf32>
    %143 = arith.mulf %142, %141 : vector<8x1024xf32>
    %144 = arith.addf %129, %143 : vector<8x1024xf32>
    %c36 = arith.constant 36 : index
    %145 = memref.load %arg1[%c36] : memref<41xf32, #tpu.memory_space<smem>>
    %c37 = arith.constant 37 : index
    %146 = memref.load %arg1[%c37] : memref<41xf32, #tpu.memory_space<smem>>
    %c38 = arith.constant 38 : index
    %147 = memref.load %arg1[%c38] : memref<41xf32, #tpu.memory_space<smem>>
    %c39 = arith.constant 39 : index
    %148 = memref.load %arg1[%c39] : memref<41xf32, #tpu.memory_space<smem>>
    %149 = vector.broadcast %145 : f32 to vector<8x1024xf32>
    %150 = arith.mulf %149, %3 : vector<8x1024xf32>
    %151 = vector.broadcast %146 : f32 to vector<8x1024xf32>
    %152 = arith.mulf %151, %8 : vector<8x1024xf32>
    %153 = arith.addf %150, %152 : vector<8x1024xf32>
    %154 = vector.broadcast %147 : f32 to vector<8x1024xf32>
    %155 = arith.addf %153, %154 : vector<8x1024xf32>
    %156 = math.tanh %155 : vector<8x1024xf32>
    %157 = vector.broadcast %148 : f32 to vector<8x1024xf32>
    %158 = arith.mulf %157, %156 : vector<8x1024xf32>
    %159 = arith.addf %144, %158 : vector<8x1024xf32>
    %c40 = arith.constant 40 : index
    %160 = memref.load %arg1[%c40] : memref<41xf32, #tpu.memory_space<smem>>
    %161 = vector.broadcast %160 : f32 to vector<8x1024xf32>
    %162 = arith.addf %159, %161 : vector<8x1024xf32>
    %c0_7 = arith.constant 0 : index
    %c0_8 = arith.constant 0 : index
    %163 = vector.load %arg4[%c0_7, %c0_8] : memref<8x1024xf32, #tpu.memory_space<vmem>>, vector<8x1024xf32>
    tpu.vector_store %arg4[%c0_7, %c0_8], %162 {strides = array<i32>} : memref<8x1024xf32, #tpu.memory_space<vmem>>, vector<8x1024xf32>,
    return
  }
  func.func @transform_0(%arg0: i32) -> i32 {
    %c0_i32 = arith.constant 0 : i32
    %c0_i32_0 = arith.constant 0 : i32
    return %c0_i32 : i32
  }
  func.func @transform_1(%arg0: i32) -> (i32, i32) {
    %c0_i32 = arith.constant 0 : i32
    %c0_i32_0 = arith.constant 0 : i32
    return %arg0, %c0_i32 : i32, i32
  }
  func.func @transform_2(%arg0: i32) -> (i32, i32) {
    %c0_i32 = arith.constant 0 : i32
    %c0_i32_0 = arith.constant 0 : i32
    return %arg0, %c0_i32 : i32, i32
  }
  func.func @transform_3(%arg0: i32) -> (i32, i32) {
    %c0_i32 = arith.constant 0 : i32
    %c0_i32_0 = arith.constant 0 : i32
    return %arg0, %c0_i32 : i32, i32
  }
}

</mosaic_0001>

<llo_original>
// kernel: simplenet_forward_batched.1
$region0: #{simplenet_forward_batched.1}
  #allocation0 [shape = 'u32[]', space=smem, size = 0x4, offset = 0x4, fixed_abs, tag = 'smem constant byte address 0x4 - core index']
  #allocation1 [shape = 'u32[144,128]{1,0:T(1,128)}', space=vmem, size = 0x12000, scoped, tag = 'internal scratch']
  %s0 = inlined_call_operand.vmem [shape: f32[41], index: 0, kind: input, shape index: {}]
  %s1 = inlined_call_operand.vmem [shape: f32[16,1024], index: 1, kind: input, shape index: {}]
  %s2 = inlined_call_operand.vmem [shape: f32[16,1024], index: 2, kind: input, shape index: {}]
  %s3 = inlined_call_operand.vmem [shape: f32[16,1024], index: 3, kind: output, shape index: {}]
  %s4 = sld [smem:[#allocation0]]
  $region49: #{simplenet_forward_batched.1} parent=0
    _
  %s6 = ssub.s32 1, %s4
  %s7 = scalar_select 0, %s6, %s4
  $region1: #{simplenet_forward_batched.1} parent=0
    #allocation2 [shape = 'u8[512]{0}', space=smem, size = 0x200, scoped, tag = 'input window, operand 0, single buffered']
    #allocation3 [shape = 's32[2]{0}', space=sflag, size = 0x8, scoped, tag = 'scoped memory for simplenet_forward_batched.1']
    %8 = vsyncpa [#allocation3], 0
    loop: start=0, step=1, limit=4
    $region2: #{simplenet_forward_batched.1} parent=1 // loop_pre_header
      _
    $region3: #{simplenet_forward_batched.1} parent=1 // loop_header
      %s10 = sphi 0, %s14
      %p11 = scmp.ge.s32.totalorder %s10, 4
      %s18 = sphi 0, %s18
      %s20 = sphi 0, %s18
      %s21 = sphi 0, %s20
      %s35 = sphi 0, %s21
      %s41 = sphi 0, %s43
      %s44 = sphi 0, %s41
      %s45 = sphi 0, %s44
      %s61 = sphi 0, %s45
      %s67 = sphi 0, %s69
      %s70 = sphi 0, %s67
      %s71 = sphi 0, %s70
      %s87 = sphi 0, %s71
      %s93 = sphi 0, %s95
      %s96 = sphi 0, %s93
      %s97 = sphi 0, %s96
      %s113 = sphi 0, %s97
    $region4: #{simplenet_forward_batched.1} parent=1 // loop_header_branch
      %13 = sbr.rel (%p11) target = $region8
    $region5: #{simplenet_forward_batched.1} parent=1 // loop_body
      %s15 = ssub.s32 %s10, 1
      %s16 = ssub.s32 %s10, 2
      %s17 = sadd.s32 %s10, 1
      %s19 = sadd.s32 %s18, 1
      %p22 = scmp.eq.s32.totalorder %s10, 1
      %p23 = scmp.ne.s32.totalorder %s18, %s20
      %p24 = scmp.eq.s32.totalorder %s10, 0
      %p25 = por %p23, %p24
      %p26 = scmp.ne.s32.totalorder %s18, %s20
      %p27 = scmp.eq.s32.totalorder %s15, 1
      %p28 = por %p26, %p27
      %p29 = scmp.ne.s32.totalorder %s20, %s21
      %p30 = scmp.eq.s32.totalorder %s15, 0
      %p31 = por %p29, %p30
      %p32 = scmp.ne.s32.totalorder %s20, %s21
      %p33 = scmp.eq.s32.totalorder %s16, 1
      %p34 = por %p32, %p33
      %p36 = scmp.ne.s32.totalorder %s21, %s35
      %p37 = scmp.eq.s32.totalorder %s16, 0
      %p38 = por %p36, %p37
      %s39 = ssub.s32 %s10, %s17
      %p40 = scmp.eq.s32.totalorder %s39, 0
      %s42 = sadd.s32 %s41, 1
      %s43 = scalar_select %p40, %s41, %s42
      %p46 = pneg %p40
      %p47 = scmp.eq.s32.totalorder %s10, 1
      %p48 = por %p46, %p47
      %p49 = scmp.ne.s32.totalorder %s41, %s44
      %p50 = scmp.eq.s32.totalorder %s10, 0
      %p51 = por %p49, %p50
      %p52 = scmp.ne.s32.totalorder %s41, %s44
      %p53 = scmp.eq.s32.totalorder %s15, 1
      %p54 = por %p52, %p53
      %p55 = scmp.ne.s32.totalorder %s44, %s45
      %p56 = scmp.eq.s32.totalorder %s15, 0
      %p57 = por %p55, %p56
      %p58 = scmp.ne.s32.totalorder %s44, %s45
      %p59 = scmp.eq.s32.totalorder %s16, 1
      %p60 = por %p58, %p59
      %p62 = scmp.ne.s32.totalorder %s45, %s61
      %p63 = scmp.eq.s32.totalorder %s16, 0
      %p64 = por %p62, %p63
      %s65 = ssub.s32 %s10, %s17
      %p66 = scmp.eq.s32.totalorder %s65, 0
      %s68 = sadd.s32 %s67, 1
      %s69 = scalar_select %p66, %s67, %s68
      %p72 = pneg %p66
      %p73 = scmp.eq.s32.totalorder %s10, 1
      %p74 = por %p72, %p73
      %p75 = scmp.ne.s32.totalorder %s67, %s70
      %p76 = scmp.eq.s32.totalorder %s10, 0
      %p77 = por %p75, %p76
      %p78 = scmp.ne.s32.totalorder %s67, %s70
      %p79 = scmp.eq.s32.totalorder %s15, 1
      %p80 = por %p78, %p79
      %p81 = scmp.ne.s32.totalorder %s70, %s71
      %p82 = scmp.eq.s32.totalorder %s15, 0
      %p83 = por %p81, %p82
      %p84 = scmp.ne.s32.totalorder %s70, %s71
      %p85 = scmp.eq.s32.totalorder %s16, 1
      %p86 = por %p84, %p85
      %p88 = scmp.ne.s32.totalorder %s71, %s87
      %p89 = scmp.eq.s32.totalorder %s16, 0
      %p90 = por %p88, %p89
      %s91 = ssub.s32 %s10, %s17
      %p92 = scmp.eq.s32.totalorder %s91, 0
      %s94 = sadd.s32 %s93, 1
      %s95 = scalar_select %p92, %s93, %s94
      %p98 = pneg %p92
      %p99 = scmp.eq.s32.totalorder %s10, 1
      %p100 = por %p98, %p99
      %p101 = scmp.ne.s32.totalorder %s93, %s96
      %p102 = scmp.eq.s32.totalorder %s10, 0
      %p103 = por %p101, %p102
      %p104 = scmp.ne.s32.totalorder %s93, %s96
      %p105 = scmp.eq.s32.totalorder %s15, 1
      %p106 = por %p104, %p105
      %p107 = scmp.ne.s32.totalorder %s96, %s97
      %p108 = scmp.eq.s32.totalorder %s15, 0
      %p109 = por %p107, %p108
      %p110 = scmp.ne.s32.totalorder %s96, %s97
      %p111 = scmp.eq.s32.totalorder %s16, 1
      %p112 = por %p110, %p111
      %p114 = scmp.ne.s32.totalorder %s97, %s113
      %p115 = scmp.eq.s32.totalorder %s16, 0
      %p116 = por %p114, %p115
      %p117 = scmp.le.s32.totalorder 1, %s10
      %p118 = scmp.lt.s32.totalorder %s10, 3
      %p119 = pnand %p117, %p118
      %p120 = pneg %p119
      // Predicated region
      $region9: #{simplenet_forward_batched.1} parent=5 // pred_check
        _
      $region10: #{simplenet_forward_batched.1} parent=5 // pred_check_branch
        %122 = sbr.rel (%p119) target = $region12
      $region11: #{simplenet_forward_batched.1} parent=5 // pred_region
        %s123 = ssub.s32 %s10, 1
        // Predicated region
        $region13: #{simplenet_forward_batched.1} parent=11 // pred_check
          %p124 = pneg %p31
        $region14: #{simplenet_forward_batched.1} parent=11 // pred_check_branch
          %126 = sbr.rel (%p124) target = $region16
        $region15: #{simplenet_forward_batched.1} parent=11 // pred_region
          %s128 = ssub.s32 16, 16
          %129 = vsyncadd [#allocation3], %s128
          %s131 = sshll.u32 %s0, 4
          %s132 = int_to_ptr.vmem [resolvable:$true] %s131
          %134 = dma.vmem_to_smem %s132, 16, [#allocation2], [#allocation3]
        $region16: #{simplenet_forward_batched.1} parent=11 // pred_fallthru
          _
      $region12: #{simplenet_forward_batched.1} parent=5 // pred_fallthru
        _
      %p135 = scmp.lt.s32.totalorder %s10, 2
      // Predicated region
      $region17: #{simplenet_forward_batched.1} parent=5 // pred_check
        %p136 = pneg %p135
      $region18: #{simplenet_forward_batched.1} parent=5 // pred_check_branch
        %138 = sbr.rel (%p136) target = $region20
      $region19: #{simplenet_forward_batched.1} parent=5 // pred_region
        // Predicated region
        $region21: #{simplenet_forward_batched.1} parent=19 // pred_check
          %p139 = pneg %p51
        $region22: #{simplenet_forward_batched.1} parent=19 // pred_check_branch
          %141 = sbr.rel (%p139) target = $region24
        $region23: #{simplenet_forward_batched.1} parent=19 // pred_region
          %p142 = scmp.lt.s32.totalorder %s10, 1
          %s143 = scalar_select %p142, %s10, 1
          %s144 = smul.addr %s143, 8
          %s145 = smul.addr %s144, 8
          %s146 = scalar_lea.vmem %s1, %s145
        $region24: #{simplenet_forward_batched.1} parent=19 // pred_fallthru
          _
        // Predicated region
        $region25: #{simplenet_forward_batched.1} parent=19 // pred_check
          %p147 = pneg %p77
        $region26: #{simplenet_forward_batched.1} parent=19 // pred_check_branch
          %149 = sbr.rel (%p147) target = $region28
        $region27: #{simplenet_forward_batched.1} parent=19 // pred_region
          %p150 = scmp.lt.s32.totalorder %s10, 1
          %s151 = scalar_select %p150, %s10, 1
          %s152 = smul.addr %s151, 8
          %s153 = smul.addr %s152, 8
          %s154 = scalar_lea.vmem %s2, %s153
        $region28: #{simplenet_forward_batched.1} parent=19 // pred_fallthru
          _
      $region20: #{simplenet_forward_batched.1} parent=5 // pred_fallthru
        _
      %p155 = scmp.le.s32.totalorder 1, %s10
      %p156 = scmp.lt.s32.totalorder %s10, 3
      %p157 = pnand %p155, %p156
      %p158 = pneg %p157
      // Predicated region
      $region29: #{simplenet_forward_batched.1} parent=5 // pred_check
        _
      $region30: #{simplenet_forward_batched.1} parent=5 // pred_check_branch
        %160 = sbr.rel (%p157) target = $region32
      $region31: #{simplenet_forward_batched.1} parent=5 // pred_region
        %s161 = ssub.s32 %s10, 1
        // Predicated region
        $region33: #{simplenet_forward_batched.1} parent=31 // pred_check
          %p162 = pneg %p31
        $region34: #{simplenet_forward_batched.1} parent=31 // pred_check_branch
          %164 = sbr.rel (%p162) target = $region36
        $region35: #{simplenet_forward_batched.1} parent=31 // pred_region
          %165 = dma.done [#allocation3], 16
        $region36: #{simplenet_forward_batched.1} parent=31 // pred_fallthru
          _
        %166 = sfence
        %p167 = pneg %p31
        %p168 = pneg %p28
        %p169 = scmp.lt.s32.totalorder %s15, 1
        %s170 = scalar_select %p169, %s15, 1
        %s171 = smul.addr %s170, 8
        %s172 = smul.addr %s171, 8
        %s173 = scalar_lea.vmem %s1, %s172
        %p174 = pneg %p57
        %p175 = pneg %p54
        %p176 = scmp.lt.s32.totalorder %s15, 1
        %s177 = scalar_select %p176, %s15, 1
        %s178 = smul.addr %s177, 8
        %s179 = smul.addr %s178, 8
        %s180 = scalar_lea.vmem %s2, %s179
        %p181 = pneg %p83
        %p182 = pneg %p80
        %p183 = pneg %p109
        %p184 = pneg %p106
        %p185 = scmp.lt.s32.totalorder %s15, 1
        %s186 = scalar_select %p185, %s15, 1
        %s187 = smul.addr %s186, 8
        %s188 = smul.addr %s187, 8
        %s189 = scalar_lea.vmem %s3, %s188
        %p190 = scmp.lt.s32.totalorder %s15, 1
        %s191 = scalar_select %p190, %s15, 1
        %s192 = smul.addr %s191, 8
        %s193 = smul.addr %s192, 8
        %s194 = scalar_lea.vmem %s1, %s193
        %p195 = scmp.lt.s32.totalorder %s15, 1
        %s196 = scalar_select %p195, %s15, 1
        %s197 = smul.addr %s196, 8
        %s198 = smul.addr %s197, 8
        %s199 = scalar_lea.vmem %s2, %s198
        %p200 = scmp.lt.s32.totalorder %s15, 1
        %s201 = scalar_select %p200, %s15, 1
        %s202 = smul.addr %s201, 8
        %s203 = smul.addr %s202, 8
        %s204 = scalar_lea.vmem %s3, %s203
        %v205 = vld [vmem:[%s194] sm:$0xff]
        %v206 = vld [vmem:[%s194 + $0x8] sm:$0xff]
        %v207 = vld [vmem:[%s194 + $0x10] sm:$0xff]
        %v208 = vld [vmem:[%s194 + $0x18] sm:$0xff]
        %v209 = vld [vmem:[%s194 + $0x20] sm:$0xff]
        %v210 = vld [vmem:[%s194 + $0x28] sm:$0xff]
        %v211 = vld [vmem:[%s194 + $0x30] sm:$0xff]
        %v212 = vld [vmem:[%s194 + $0x38] sm:$0xff]
        %v213 = vmul.f32 %v205, 0.5
        %v214 = vmul.f32 %v206, 0.5
        %v215 = vmul.f32 %v207, 0.5
        %v216 = vmul.f32 %v208, 0.5
        %v217 = vmul.f32 %v209, 0.5
        %v218 = vmul.f32 %v210, 0.5
        %v219 = vmul.f32 %v211, 0.5
        %v220 = vmul.f32 %v212, 0.5
        %v221 = vtanh.pop %v213
        %v222 = vtanh.pop %v214
        %v223 = vtanh.pop %v215
        %v224 = vtanh.pop %v216
        %v225 = vtanh.pop %v217
        %v226 = vtanh.pop %v218
        %v227 = vtanh.pop %v219
        %v228 = vtanh.pop %v220
        %v229 = vld [vmem:[%s199] sm:$0xff]
        %v230 = vld [vmem:[%s199 + $0x8] sm:$0xff]
        %v231 = vld [vmem:[%s199 + $0x10] sm:$0xff]
        %v232 = vld [vmem:[%s199 + $0x18] sm:$0xff]
        %v233 = vld [vmem:[%s199 + $0x20] sm:$0xff]
        %v234 = vld [vmem:[%s199 + $0x28] sm:$0xff]
        %v235 = vld [vmem:[%s199 + $0x30] sm:$0xff]
        %v236 = vld [vmem:[%s199 + $0x38] sm:$0xff]
        %v237 = vmul.f32 %v229, 2.0
        %v238 = vmul.f32 %v230, 2.0
        %v239 = vmul.f32 %v231, 2.0
        %v240 = vmul.f32 %v232, 2.0
        %v241 = vmul.f32 %v233, 2.0
        %v242 = vmul.f32 %v234, 2.0
        %v243 = vmul.f32 %v235, 2.0
        %v244 = vmul.f32 %v236, 2.0
        %v245 = vsub.f32 %v237, 1.0
        %v246 = vsub.f32 %v238, 1.0
        %v247 = vsub.f32 %v239, 1.0
        %v248 = vsub.f32 %v240, 1.0
        %v249 = vsub.f32 %v241, 1.0
        %v250 = vsub.f32 %v242, 1.0
        %v251 = vsub.f32 %v243, 1.0
        %v252 = vsub.f32 %v244, 1.0
        %s253 = sld [smem:[#allocation2]]
        %s254 = sld [smem:[#allocation2 + $0x1]]
        %s255 = sld [smem:[#allocation2 + $0x2]]
        %s256 = sld [smem:[#allocation2 + $0x3]]
        %v257 = vstv %s253
        %v258 = vmul.f32 %v257, %v221
        %v259 = vmul.f32 %v257, %v222
        %v260 = vmul.f32 %v257, %v223
        %v261 = vmul.f32 %v257, %v224
        %v262 = vmul.f32 %v257, %v225
        %v263 = vmul.f32 %v257, %v226
        %v264 = vmul.f32 %v257, %v227
        %v265 = vmul.f32 %v257, %v228
        %v266 = vstv %s254
        %v267 = vmul.f32 %v266, %v245
        %v268 = vmul.f32 %v266, %v246
        %v269 = vmul.f32 %v266, %v247
        %v270 = vmul.f32 %v266, %v248
        %v271 = vmul.f32 %v266, %v249
        %v272 = vmul.f32 %v266, %v250
        %v273 = vmul.f32 %v266, %v251
        %v274 = vmul.f32 %v266, %v252
        %v275 = vadd.f32 %v258, %v267
        %v276 = vadd.f32 %v259, %v268
        %v277 = vadd.f32 %v260, %v269
        %v278 = vadd.f32 %v261, %v270
        %v279 = vadd.f32 %v262, %v271
        %v280 = vadd.f32 %v263, %v272
        %v281 = vadd.f32 %v264, %v273
        %v282 = vadd.f32 %v265, %v274
        %v283 = vstv %s255
        %v284 = vadd.f32 %v275, %v283
        %v285 = vadd.f32 %v276, %v283
        %v286 = vadd.f32 %v277, %v283
        %v287 = vadd.f32 %v278, %v283
        %v288 = vadd.f32 %v279, %v283
        %v289 = vadd.f32 %v280, %v283
        %v290 = vadd.f32 %v281, %v283
        %v291 = vadd.f32 %v282, %v283
        %v292 = vtanh.pop %v284
        %v293 = vtanh.pop %v285
        %v294 = vtanh.pop %v286
        %v295 = vtanh.pop %v287
        %v296 = vtanh.pop %v288
        %v297 = vtanh.pop %v289
        %v298 = vtanh.pop %v290
        %v299 = vtanh.pop %v291
        %v300 = vstv %s256
        %v301 = vmul.f32 %v300, %v292
        %v302 = vmul.f32 %v300, %v293
        %v303 = vmul.f32 %v300, %v294
        %v304 = vmul.f32 %v300, %v295
        %v305 = vmul.f32 %v300, %v296
        %v306 = vmul.f32 %v300, %v297
        %v307 = vmul.f32 %v300, %v298
        %v308 = vmul.f32 %v300, %v299
        %v309 = vadd.f32 %v301, 0.0
        %v310 = vadd.f32 %v302, 0.0
        %v311 = vadd.f32 %v303, 0.0
        %v312 = vadd.f32 %v304, 0.0
        %v313 = vadd.f32 %v305, 0.0
        %v314 = vadd.f32 %v306, 0.0
        %v315 = vadd.f32 %v307, 0.0
        %v316 = vadd.f32 %v308, 0.0
        %s317 = sld [smem:[#allocation2 + $0x4]]
        %s318 = sld [smem:[#allocation2 + $0x5]]
        %s319 = sld [smem:[#allocation2 + $0x6]]
        %s320 = sld [smem:[#allocation2 + $0x7]]
        %v321 = vstv %s317
        %v322 = vmul.f32 %v321, %v221
        %v323 = vmul.f32 %v321, %v222
        %v324 = vmul.f32 %v321, %v223
        %v325 = vmul.f32 %v321, %v224
        %v326 = vmul.f32 %v321, %v225
        %v327 = vmul.f32 %v321, %v226
        %v328 = vmul.f32 %v321, %v227
        %v329 = vmul.f32 %v321, %v228
        %v330 = vstv %s318
        %v331 = vmul.f32 %v330, %v245
        %v332 = vmul.f32 %v330, %v246
        %v333 = vmul.f32 %v330, %v247
        %v334 = vmul.f32 %v330, %v248
        %v335 = vmul.f32 %v330, %v249
        %v336 = vmul.f32 %v330, %v250
        %v337 = vmul.f32 %v330, %v251
        %v338 = vmul.f32 %v330, %v252
        %v339 = vadd.f32 %v322, %v331
        %v340 = vadd.f32 %v323, %v332
        %v341 = vadd.f32 %v324, %v333
        %v342 = vadd.f32 %v325, %v334
        %v343 = vadd.f32 %v326, %v335
        %v344 = vadd.f32 %v327, %v336
        %v345 = vadd.f32 %v328, %v337
        %v346 = vadd.f32 %v329, %v338
        %v347 = vstv %s319
        %v348 = vadd.f32 %v339, %v347
        %v349 = vadd.f32 %v340, %v347
        %v350 = vadd.f32 %v341, %v347
        %v351 = vadd.f32 %v342, %v347
        %v352 = vadd.f32 %v343, %v347
        %v353 = vadd.f32 %v344, %v347
        %v354 = vadd.f32 %v345, %v347
        %v355 = vadd.f32 %v346, %v347
        %v356 = vtanh.pop %v348
        %v357 = vtanh.pop %v349
        %v358 = vtanh.pop %v350
        %v359 = vtanh.pop %v351
        %v360 = vtanh.pop %v352
        %v361 = vtanh.pop %v353
        %v362 = vtanh.pop %v354
        %v363 = vtanh.pop %v355
        %v364 = vstv %s320
        %v365 = vmul.f32 %v364, %v356
        %v366 = vmul.f32 %v364, %v357
        %v367 = vmul.f32 %v364, %v358
        %v368 = vmul.f32 %v364, %v359
        %v369 = vmul.f32 %v364, %v360
        %v370 = vmul.f32 %v364, %v361
        %v371 = vmul.f32 %v364, %v362
        %v372 = vmul.f32 %v364, %v363
        %v373 = vadd.f32 %v309, %v365
        %v374 = vadd.f32 %v310, %v366
        %v375 = vadd.f32 %v311, %v367
        %v376 = vadd.f32 %v312, %v368
        %v377 = vadd.f32 %v313, %v369
        %v378 = vadd.f32 %v314, %v370
        %v379 = vadd.f32 %v315, %v371
        %v380 = vadd.f32 %v316, %v372
        %s381 = sld [smem:[#allocation2 + $0x8]]
        %s382 = sld [smem:[#allocation2 + $0x9]]
        %s383 = sld [smem:[#allocation2 + $0xa]]
        %s384 = sld [smem:[#allocation2 + $0xb]]
        %v385 = vstv %s381
        %v386 = vmul.f32 %v385, %v221
        %v387 = vmul.f32 %v385, %v222
        %v388 = vmul.f32 %v385, %v223
        %v389 = vmul.f32 %v385, %v224
        %v390 = vmul.f32 %v385, %v225
        %v391 = vmul.f32 %v385, %v226
        %v392 = vmul.f32 %v385, %v227
        %v393 = vmul.f32 %v385, %v228
        %v394 = vstv %s382
        %v395 = vmul.f32 %v394, %v245
        %v396 = vmul.f32 %v394, %v246
        %v397 = vmul.f32 %v394, %v247
        %v398 = vmul.f32 %v394, %v248
        %v399 = vmul.f32 %v394, %v249
        %v400 = vmul.f32 %v394, %v250
        %v401 = vmul.f32 %v394, %v251
        %v402 = vmul.f32 %v394, %v252
        %v403 = vadd.f32 %v386, %v395
        %v404 = vadd.f32 %v387, %v396
        %v405 = vadd.f32 %v388, %v397
        %v406 = vadd.f32 %v389, %v398
        %v407 = vadd.f32 %v390, %v399
        %v408 = vadd.f32 %v391, %v400
        %v409 = vadd.f32 %v392, %v401
        %v410 = vadd.f32 %v393, %v402
        %v411 = vstv %s383
        %v412 = vadd.f32 %v403, %v411
        %v413 = vadd.f32 %v404, %v411
        %v414 = vadd.f32 %v405, %v411
        %v415 = vadd.f32 %v406, %v411
        %v416 = vadd.f32 %v407, %v411
        %v417 = vadd.f32 %v408, %v411
        %v418 = vadd.f32 %v409, %v411
        %v419 = vadd.f32 %v410, %v411
        %v420 = vtanh.pop %v412
        %v421 = vtanh.pop %v413
        %v422 = vtanh.pop %v414
        %v423 = vtanh.pop %v415
        %v424 = vtanh.pop %v416
        %v425 = vtanh.pop %v417
        %v426 = vtanh.pop %v418
        %v427 = vtanh.pop %v419
        %v428 = vstv %s384
        %v429 = vmul.f32 %v428, %v420
        %v430 = vmul.f32 %v428, %v421
        %v431 = vmul.f32 %v428, %v422
        %v432 = vmul.f32 %v428, %v423
        %v433 = vmul.f32 %v428, %v424
        %v434 = vmul.f32 %v428, %v425
        %v435 = vmul.f32 %v428, %v426
        %v436 = vmul.f32 %v428, %v427
        %v437 = vadd.f32 %v373, %v429
        %v438 = vadd.f32 %v374, %v430
        %v439 = vadd.f32 %v375, %v431
        %v440 = vadd.f32 %v376, %v432
        %v441 = vadd.f32 %v377, %v433
        %v442 = vadd.f32 %v378, %v434
        %v443 = vadd.f32 %v379, %v435
        %v444 = vadd.f32 %v380, %v436
        %s445 = sld [smem:[#allocation2 + $0xc]]
        %s446 = sld [smem:[#allocation2 + $0xd]]
        %s447 = sld [smem:[#allocation2 + $0xe]]
        %s448 = sld [smem:[#allocation2 + $0xf]]
        %v449 = vstv %s445
        %v450 = vmul.f32 %v449, %v221
        %v451 = vmul.f32 %v449, %v222
        %v452 = vmul.f32 %v449, %v223
        %v453 = vmul.f32 %v449, %v224
        %v454 = vmul.f32 %v449, %v225
        %v455 = vmul.f32 %v449, %v226
        %v456 = vmul.f32 %v449, %v227
        %v457 = vmul.f32 %v449, %v228
        %v458 = vstv %s446
        %v459 = vmul.f32 %v458, %v245
        %v460 = vmul.f32 %v458, %v246
        %v461 = vmul.f32 %v458, %v247
        %v462 = vmul.f32 %v458, %v248
        %v463 = vmul.f32 %v458, %v249
        %v464 = vmul.f32 %v458, %v250
        %v465 = vmul.f32 %v458, %v251
        %v466 = vmul.f32 %v458, %v252
        %v467 = vadd.f32 %v450, %v459
        %v468 = vadd.f32 %v451, %v460
        %v469 = vadd.f32 %v452, %v461
        %v470 = vadd.f32 %v453, %v462
        %v471 = vadd.f32 %v454, %v463
        %v472 = vadd.f32 %v455, %v464
        %v473 = vadd.f32 %v456, %v465
        %v474 = vadd.f32 %v457, %v466
        %v475 = vstv %s447
        %v476 = vadd.f32 %v467, %v475
        %v477 = vadd.f32 %v468, %v475
        %v478 = vadd.f32 %v469, %v475
        %v479 = vadd.f32 %v470, %v475
        %v480 = vadd.f32 %v471, %v475
        %v481 = vadd.f32 %v472, %v475
        %v482 = vadd.f32 %v473, %v475
        %v483 = vadd.f32 %v474, %v475
        %v484 = vtanh.pop %v476
        %v485 = vtanh.pop %v477
        %v486 = vtanh.pop %v478
        %v487 = vtanh.pop %v479
        %v488 = vtanh.pop %v480
        %v489 = vtanh.pop %v481
        %v490 = vtanh.pop %v482
        %v491 = vtanh.pop %v483
        %v492 = vstv %s448
        %v493 = vmul.f32 %v492, %v484
        %v494 = vmul.f32 %v492, %v485
        %v495 = vmul.f32 %v492, %v486
        %v496 = vmul.f32 %v492, %v487
        %v497 = vmul.f32 %v492, %v488
        %v498 = vmul.f32 %v492, %v489
        %v499 = vmul.f32 %v492, %v490
        %v500 = vmul.f32 %v492, %v491
        %v501 = vadd.f32 %v437, %v493
        %v502 = vadd.f32 %v438, %v494
        %v503 = vadd.f32 %v439, %v495
        %v504 = vadd.f32 %v440, %v496
        %v505 = vadd.f32 %v441, %v497
        %v506 = vadd.f32 %v442, %v498
        %v507 = vadd.f32 %v443, %v499
        %v508 = vadd.f32 %v444, %v500
        %s509 = sld [smem:[#allocation2 + $0x10]]
        %s510 = sld [smem:[#allocation2 + $0x11]]
        %s511 = sld [smem:[#allocation2 + $0x12]]
        %s512 = sld [smem:[#allocation2 + $0x13]]
        %v513 = vstv %s509
        %v514 = vmul.f32 %v513, %v221
        %v515 = vmul.f32 %v513, %v222
        %v516 = vmul.f32 %v513, %v223
        %v517 = vmul.f32 %v513, %v224
        %v518 = vmul.f32 %v513, %v225
        %v519 = vmul.f32 %v513, %v226
        %v520 = vmul.f32 %v513, %v227
        %v521 = vmul.f32 %v513, %v228
        %v522 = vstv %s510
        %v523 = vmul.f32 %v522, %v245
        %v524 = vmul.f32 %v522, %v246
        %v525 = vmul.f32 %v522, %v247
        %v526 = vmul.f32 %v522, %v248
        %v527 = vmul.f32 %v522, %v249
        %v528 = vmul.f32 %v522, %v250
        %v529 = vmul.f32 %v522, %v251
        %v530 = vmul.f32 %v522, %v252
        %v531 = vadd.f32 %v514, %v523
        %v532 = vadd.f32 %v515, %v524
        %v533 = vadd.f32 %v516, %v525
        %v534 = vadd.f32 %v517, %v526
        %v535 = vadd.f32 %v518, %v527
        %v536 = vadd.f32 %v519, %v528
        %v537 = vadd.f32 %v520, %v529
        %v538 = vadd.f32 %v521, %v530
        %v539 = vstv %s511
        %v540 = vadd.f32 %v531, %v539
        %v541 = vadd.f32 %v532, %v539
        %v542 = vadd.f32 %v533, %v539
        %v543 = vadd.f32 %v534, %v539
        %v544 = vadd.f32 %v535, %v539
        %v545 = vadd.f32 %v536, %v539
        %v546 = vadd.f32 %v537, %v539
        %v547 = vadd.f32 %v538, %v539
        %v548 = vtanh.pop %v540
        %v549 = vtanh.pop %v541
        %v550 = vtanh.pop %v542
        %v551 = vtanh.pop %v543
        %v552 = vtanh.pop %v544
        %v553 = vtanh.pop %v545
        %v554 = vtanh.pop %v546
        %v555 = vtanh.pop %v547
        %v556 = vstv %s512
        %v557 = vmul.f32 %v556, %v548
        %v558 = vmul.f32 %v556, %v549
        %v559 = vmul.f32 %v556, %v550
        %v560 = vmul.f32 %v556, %v551
        %v561 = vmul.f32 %v556, %v552
        %v562 = vmul.f32 %v556, %v553
        %v563 = vmul.f32 %v556, %v554
        %v564 = vmul.f32 %v556, %v555
        %v565 = vadd.f32 %v501, %v557
        %v566 = vadd.f32 %v502, %v558
        %v567 = vadd.f32 %v503, %v559
        %v568 = vadd.f32 %v504, %v560
        %v569 = vadd.f32 %v505, %v561
        %v570 = vadd.f32 %v506, %v562
        %v571 = vadd.f32 %v507, %v563
        %v572 = vadd.f32 %v508, %v564
        %s573 = sld [smem:[#allocation2 + $0x14]]
        %s574 = sld [smem:[#allocation2 + $0x15]]
        %s575 = sld [smem:[#allocation2 + $0x16]]
        %s576 = sld [smem:[#allocation2 + $0x17]]
        %v577 = vstv %s573
        %v578 = vmul.f32 %v577, %v221
        %v579 = vmul.f32 %v577, %v222
        %v580 = vmul.f32 %v577, %v223
        %v581 = vmul.f32 %v577, %v224
        %v582 = vmul.f32 %v577, %v225
        %v583 = vmul.f32 %v577, %v226
        %v584 = vmul.f32 %v577, %v227
        %v585 = vmul.f32 %v577, %v228
        %v586 = vstv %s574
        %v587 = vmul.f32 %v586, %v245
        %v588 = vmul.f32 %v586, %v246
        %v589 = vmul.f32 %v586, %v247
        %v590 = vmul.f32 %v586, %v248
        %v591 = vmul.f32 %v586, %v249
        %v592 = vmul.f32 %v586, %v250
        %v593 = vmul.f32 %v586, %v251
        %v594 = vmul.f32 %v586, %v252
        %v595 = vadd.f32 %v578, %v587
        %v596 = vadd.f32 %v579, %v588
        %v597 = vadd.f32 %v580, %v589
        %v598 = vadd.f32 %v581, %v590
        %v599 = vadd.f32 %v582, %v591
        %v600 = vadd.f32 %v583, %v592
        %v601 = vadd.f32 %v584, %v593
        %v602 = vadd.f32 %v585, %v594
        %v603 = vstv %s575
        %v604 = vadd.f32 %v595, %v603
        %v605 = vadd.f32 %v596, %v603
        %v606 = vadd.f32 %v597, %v603
        %v607 = vadd.f32 %v598, %v603
        %v608 = vadd.f32 %v599, %v603
        %v609 = vadd.f32 %v600, %v603
        %v610 = vadd.f32 %v601, %v603
        %v611 = vadd.f32 %v602, %v603
        %v612 = vtanh.pop %v604
        %v613 = vtanh.pop %v605
        %v614 = vtanh.pop %v606
        %v615 = vtanh.pop %v607
        %v616 = vtanh.pop %v608
        %v617 = vtanh.pop %v609
        %v618 = vtanh.pop %v610
        %v619 = vtanh.pop %v611
        %v620 = vstv %s576
        %v621 = vmul.f32 %v620, %v612
        %v622 = vmul.f32 %v620, %v613
        %v623 = vmul.f32 %v620, %v614
        %v624 = vmul.f32 %v620, %v615
        %v625 = vmul.f32 %v620, %v616
        %v626 = vmul.f32 %v620, %v617
        %v627 = vmul.f32 %v620, %v618
        %v628 = vmul.f32 %v620, %v619
        %v629 = vadd.f32 %v565, %v621
        %v630 = vadd.f32 %v566, %v622
        %v631 = vadd.f32 %v567, %v623
        %v632 = vadd.f32 %v568, %v624
        %v633 = vadd.f32 %v569, %v625
        %v634 = vadd.f32 %v570, %v626
        %v635 = vadd.f32 %v571, %v627
        %v636 = vadd.f32 %v572, %v628
        %s637 = sld [smem:[#allocation2 + $0x18]]
        %s638 = sld [smem:[#allocation2 + $0x19]]
        %s639 = sld [smem:[#allocation2 + $0x1a]]
        %s640 = sld [smem:[#allocation2 + $0x1b]]
        %v641 = vstv %s637
        %v642 = vmul.f32 %v641, %v221
        %v643 = vmul.f32 %v641, %v222
        %v644 = vmul.f32 %v641, %v223
        %v645 = vmul.f32 %v641, %v224
        %v646 = vmul.f32 %v641, %v225
        %v647 = vmul.f32 %v641, %v226
        %v648 = vmul.f32 %v641, %v227
        %v649 = vmul.f32 %v641, %v228
        %v650 = vstv %s638
        %v651 = vmul.f32 %v650, %v245
        %v652 = vmul.f32 %v650, %v246
        %v653 = vmul.f32 %v650, %v247
        %v654 = vmul.f32 %v650, %v248
        %v655 = vmul.f32 %v650, %v249
        %v656 = vmul.f32 %v650, %v250
        %v657 = vmul.f32 %v650, %v251
        %v658 = vmul.f32 %v650, %v252
        %v659 = vadd.f32 %v642, %v651
        %v660 = vadd.f32 %v643, %v652
        %v661 = vadd.f32 %v644, %v653
        %v662 = vadd.f32 %v645, %v654
        %v663 = vadd.f32 %v646, %v655
        %v664 = vadd.f32 %v647, %v656
        %v665 = vadd.f32 %v648, %v657
        %v666 = vadd.f32 %v649, %v658
        %v667 = vstv %s639
        %v668 = vadd.f32 %v659, %v667
        %v669 = vadd.f32 %v660, %v667
        %v670 = vadd.f32 %v661, %v667
        %v671 = vadd.f32 %v662, %v667
        %v672 = vadd.f32 %v663, %v667
        %v673 = vadd.f32 %v664, %v667
        %v674 = vadd.f32 %v665, %v667
        %v675 = vadd.f32 %v666, %v667
        %v676 = vtanh.pop %v668
        %v677 = vtanh.pop %v669
        %v678 = vtanh.pop %v670
        %v679 = vtanh.pop %v671
        %v680 = vtanh.pop %v672
        %v681 = vtanh.pop %v673
        %v682 = vtanh.pop %v674
        %v683 = vtanh.pop %v675
        %v684 = vstv %s640
        %v685 = vmul.f32 %v684, %v676
        %v686 = vmul.f32 %v684, %v677
        %v687 = vmul.f32 %v684, %v678
        %v688 = vmul.f32 %v684, %v679
        %v689 = vmul.f32 %v684, %v680
        %v690 = vmul.f32 %v684, %v681
        %v691 = vmul.f32 %v684, %v682
        %v692 = vmul.f32 %v684, %v683
        %v693 = vadd.f32 %v629, %v685
        %v694 = vadd.f32 %v630, %v686
        %v695 = vadd.f32 %v631, %v687
        %v696 = vadd.f32 %v632, %v688
        %v697 = vadd.f32 %v633, %v689
        %v698 = vadd.f32 %v634, %v690
        %v699 = vadd.f32 %v635, %v691
        %v700 = vadd.f32 %v636, %v692
        %s701 = sld [smem:[#allocation2 + $0x1c]]
        %s702 = sld [smem:[#allocation2 + $0x1d]]
        %s703 = sld [smem:[#allocation2 + $0x1e]]
        %s704 = sld [smem:[#allocation2 + $0x1f]]
        %v705 = vstv %s701
        %v706 = vmul.f32 %v705, %v221
        %v707 = vmul.f32 %v705, %v222
        %v708 = vmul.f32 %v705, %v223
        %v709 = vmul.f32 %v705, %v224
        %v710 = vmul.f32 %v705, %v225
        %v711 = vmul.f32 %v705, %v226
        %v712 = vmul.f32 %v705, %v227
        %v713 = vmul.f32 %v705, %v228
        %v714 = vstv %s702
        %v715 = vmul.f32 %v714, %v245
        %v716 = vmul.f32 %v714, %v246
        %v717 = vmul.f32 %v714, %v247
        %v718 = vmul.f32 %v714, %v248
        %v719 = vmul.f32 %v714, %v249
        %v720 = vmul.f32 %v714, %v250
        %v721 = vmul.f32 %v714, %v251
        %v722 = vmul.f32 %v714, %v252
        %v723 = vadd.f32 %v706, %v715
        %v724 = vadd.f32 %v707, %v716
        %v725 = vadd.f32 %v708, %v717
        %v726 = vadd.f32 %v709, %v718
        %v727 = vadd.f32 %v710, %v719
        %v728 = vadd.f32 %v711, %v720
        %v729 = vadd.f32 %v712, %v721
        %v730 = vadd.f32 %v713, %v722
        %v731 = vstv %s703
        %v732 = vadd.f32 %v723, %v731
        %v733 = vadd.f32 %v724, %v731
        %v734 = vadd.f32 %v725, %v731
        %v735 = vadd.f32 %v726, %v731
        %v736 = vadd.f32 %v727, %v731
        %v737 = vadd.f32 %v728, %v731
        %v738 = vadd.f32 %v729, %v731
        %v739 = vadd.f32 %v730, %v731
        %v740 = vtanh.pop %v732
        %v741 = vtanh.pop %v733
        %v742 = vtanh.pop %v734
        %v743 = vtanh.pop %v735
        %v744 = vtanh.pop %v736
        %v745 = vtanh.pop %v737
        %v746 = vtanh.pop %v738
        %v747 = vtanh.pop %v739
        %v748 = vstv %s704
        %v749 = vmul.f32 %v748, %v740
        %v750 = vmul.f32 %v748, %v741
        %v751 = vmul.f32 %v748, %v742
        %v752 = vmul.f32 %v748, %v743
        %v753 = vmul.f32 %v748, %v744
        %v754 = vmul.f32 %v748, %v745
        %v755 = vmul.f32 %v748, %v746
        %v756 = vmul.f32 %v748, %v747
        %v757 = vadd.f32 %v693, %v749
        %v758 = vadd.f32 %v694, %v750
        %v759 = vadd.f32 %v695, %v751
        %v760 = vadd.f32 %v696, %v752
        %v761 = vadd.f32 %v697, %v753
        %v762 = vadd.f32 %v698, %v754
        %v763 = vadd.f32 %v699, %v755
        %v764 = vadd.f32 %v700, %v756
        %s765 = sld [smem:[#allocation2 + $0x20]]
        %s766 = sld [smem:[#allocation2 + $0x21]]
        %s767 = sld [smem:[#allocation2 + $0x22]]
        %s768 = sld [smem:[#allocation2 + $0x23]]
        %v769 = vstv %s765
        %v770 = vmul.f32 %v769, %v221
        %v771 = vmul.f32 %v769, %v222
        %v772 = vmul.f32 %v769, %v223
        %v773 = vmul.f32 %v769, %v224
        %v774 = vmul.f32 %v769, %v225
        %v775 = vmul.f32 %v769, %v226
        %v776 = vmul.f32 %v769, %v227
        %v777 = vmul.f32 %v769, %v228
        %v778 = vstv %s766
        %v779 = vmul.f32 %v778, %v245
        %v780 = vmul.f32 %v778, %v246
        %v781 = vmul.f32 %v778, %v247
        %v782 = vmul.f32 %v778, %v248
        %v783 = vmul.f32 %v778, %v249
        %v784 = vmul.f32 %v778, %v250
        %v785 = vmul.f32 %v778, %v251
        %v786 = vmul.f32 %v778, %v252
        %v787 = vadd.f32 %v770, %v779
        %v788 = vadd.f32 %v771, %v780
        %v789 = vadd.f32 %v772, %v781
        %v790 = vadd.f32 %v773, %v782
        %v791 = vadd.f32 %v774, %v783
        %v792 = vadd.f32 %v775, %v784
        %v793 = vadd.f32 %v776, %v785
        %v794 = vadd.f32 %v777, %v786
        %v795 = vstv %s767
        %v796 = vadd.f32 %v787, %v795
        %v797 = vadd.f32 %v788, %v795
        %v798 = vadd.f32 %v789, %v795
        %v799 = vadd.f32 %v790, %v795
        %v800 = vadd.f32 %v791, %v795
        %v801 = vadd.f32 %v792, %v795
        %v802 = vadd.f32 %v793, %v795
        %v803 = vadd.f32 %v794, %v795
        %v804 = vtanh.pop %v796
        %v805 = vtanh.pop %v797
        %v806 = vtanh.pop %v798
        %v807 = vtanh.pop %v799
        %v808 = vtanh.pop %v800
        %v809 = vtanh.pop %v801
        %v810 = vtanh.pop %v802
        %v811 = vtanh.pop %v803
        %v812 = vstv %s768
        %v813 = vmul.f32 %v812, %v804
        %v814 = vmul.f32 %v812, %v805
        %v815 = vmul.f32 %v812, %v806
        %v816 = vmul.f32 %v812, %v807
        %v817 = vmul.f32 %v812, %v808
        %v818 = vmul.f32 %v812, %v809
        %v819 = vmul.f32 %v812, %v810
        %v820 = vmul.f32 %v812, %v811
        %v821 = vadd.f32 %v757, %v813
        %v822 = vadd.f32 %v758, %v814
        %v823 = vadd.f32 %v759, %v815
        %v824 = vadd.f32 %v760, %v816
        %v825 = vadd.f32 %v761, %v817
        %v826 = vadd.f32 %v762, %v818
        %v827 = vadd.f32 %v763, %v819
        %v828 = vadd.f32 %v764, %v820
        %s829 = sld [smem:[#allocation2 + $0x24]]
        %s830 = sld [smem:[#allocation2 + $0x25]]
        %s831 = sld [smem:[#allocation2 + $0x26]]
        %s832 = sld [smem:[#allocation2 + $0x27]]
        %v833 = vstv %s829
        %v834 = vmul.f32 %v833, %v221
        %v835 = vmul.f32 %v833, %v222
        %v836 = vmul.f32 %v833, %v223
        %v837 = vmul.f32 %v833, %v224
        %v838 = vmul.f32 %v833, %v225
        %v839 = vmul.f32 %v833, %v226
        %v840 = vmul.f32 %v833, %v227
        %v841 = vmul.f32 %v833, %v228
        %v842 = vstv %s830
        %v843 = vmul.f32 %v842, %v245
        %v844 = vmul.f32 %v842, %v246
        %v845 = vmul.f32 %v842, %v247
        %v846 = vmul.f32 %v842, %v248
        %v847 = vmul.f32 %v842, %v249
        %v848 = vmul.f32 %v842, %v250
        %v849 = vmul.f32 %v842, %v251
        %v850 = vmul.f32 %v842, %v252
        %v851 = vadd.f32 %v834, %v843
        %v852 = vadd.f32 %v835, %v844
        %v853 = vadd.f32 %v836, %v845
        %v854 = vadd.f32 %v837, %v846
        %v855 = vadd.f32 %v838, %v847
        %v856 = vadd.f32 %v839, %v848
        %v857 = vadd.f32 %v840, %v849
        %v858 = vadd.f32 %v841, %v850
        %v859 = vstv %s831
        %v860 = vadd.f32 %v851, %v859
        %v861 = vadd.f32 %v852, %v859
        %v862 = vadd.f32 %v853, %v859
        %v863 = vadd.f32 %v854, %v859
        %v864 = vadd.f32 %v855, %v859
        %v865 = vadd.f32 %v856, %v859
        %v866 = vadd.f32 %v857, %v859
        %v867 = vadd.f32 %v858, %v859
        %v868 = vtanh.pop %v860
        %v869 = vtanh.pop %v861
        %v870 = vtanh.pop %v862
        %v871 = vtanh.pop %v863
        %v872 = vtanh.pop %v864
        %v873 = vtanh.pop %v865
        %v874 = vtanh.pop %v866
        %v875 = vtanh.pop %v867
        %v876 = vstv %s832
        %v877 = vmul.f32 %v876, %v868
        %v878 = vmul.f32 %v876, %v869
        %v879 = vmul.f32 %v876, %v870
        %v880 = vmul.f32 %v876, %v871
        %v881 = vmul.f32 %v876, %v872
        %v882 = vmul.f32 %v876, %v873
        %v883 = vmul.f32 %v876, %v874
        %v884 = vmul.f32 %v876, %v875
        %v885 = vadd.f32 %v821, %v877
        %v886 = vadd.f32 %v822, %v878
        %v887 = vadd.f32 %v823, %v879
        %v888 = vadd.f32 %v824, %v880
        %v889 = vadd.f32 %v825, %v881
        %v890 = vadd.f32 %v826, %v882
        %v891 = vadd.f32 %v827, %v883
        %v892 = vadd.f32 %v828, %v884
        %s893 = sld [smem:[#allocation2 + $0x28]]
        %v894 = vstv %s893
        %v895 = vadd.f32 %v885, %v894
        %v896 = vadd.f32 %v886, %v894
        %v897 = vadd.f32 %v887, %v894
        %v898 = vadd.f32 %v888, %v894
        %v899 = vadd.f32 %v889, %v894
        %v900 = vadd.f32 %v890, %v894
        %v901 = vadd.f32 %v891, %v894
        %v902 = vadd.f32 %v892, %v894
        %903 = vst [vmem:[%s204] sm:$0xff] %v895
        %904 = vst [vmem:[%s204 + $0x8] sm:$0xff] %v896
        %905 = vst [vmem:[%s204 + $0x10] sm:$0xff] %v897
        %906 = vst [vmem:[%s204 + $0x18] sm:$0xff] %v898
        %907 = vst [vmem:[%s204 + $0x20] sm:$0xff] %v899
        %908 = vst [vmem:[%s204 + $0x28] sm:$0xff] %v900
        %909 = vst [vmem:[%s204 + $0x30] sm:$0xff] %v901
        %910 = vst [vmem:[%s204 + $0x38] sm:$0xff] %v902
        %p911 = scmp.lt.s32.totalorder %s15, 1
        %s912 = scalar_select %p911, %s15, 1
        %s913 = smul.addr %s912, 8
        %s914 = smul.addr %s913, 8
        %s915 = scalar_lea.vmem %s3, %s914
        // Predicated region
        $region37: #{simplenet_forward_batched.1} parent=31 // pred_check
          %p916 = pneg %p106
        $region38: #{simplenet_forward_batched.1} parent=31 // pred_check_branch
          %918 = sbr.rel (%p916) target = $region40
        $region39: #{simplenet_forward_batched.1} parent=31 // pred_region
          _
        $region40: #{simplenet_forward_batched.1} parent=31 // pred_fallthru
          _
      $region32: #{simplenet_forward_batched.1} parent=5 // pred_fallthru
        _
      %p919 = scmp.le.s32.totalorder 2, %s10
      // Predicated region
      $region41: #{simplenet_forward_batched.1} parent=5 // pred_check
        %p920 = pneg %p919
      $region42: #{simplenet_forward_batched.1} parent=5 // pred_check_branch
        %922 = sbr.rel (%p920) target = $region44
      $region43: #{simplenet_forward_batched.1} parent=5 // pred_region
        %s923 = ssub.s32 %s10, 2
        // Predicated region
        $region45: #{simplenet_forward_batched.1} parent=43 // pred_check
          %p924 = pneg %p112
        $region46: #{simplenet_forward_batched.1} parent=43 // pred_check_branch
          %926 = sbr.rel (%p924) target = $region48
        $region47: #{simplenet_forward_batched.1} parent=43 // pred_region
          %p927 = scmp.lt.s32.totalorder %s16, 1
          %s928 = scalar_select %p927, %s16, 1
          %s929 = smul.addr %s928, 8
          %s930 = smul.addr %s929, 8
          %s931 = scalar_lea.vmem %s3, %s930
        $region48: #{simplenet_forward_batched.1} parent=43 // pred_fallthru
          _
      $region44: #{simplenet_forward_batched.1} parent=5 // pred_fallthru
        _
    $region6: #{simplenet_forward_batched.1} parent=1 // loop_footer
      %s14 = sadd.s32 1, %s10
    $region7: #{simplenet_forward_batched.1} parent=1 // loop_footer_branch
      %9 = sbr.rel target = $region3
    $region8: #{simplenet_forward_batched.1} parent=1 // loop_exit
      _
    %932 = vsyncpa [#allocation3], 1
    %s933 = scalar_lea.sflag [#allocation3], 1
    %934 = vsyncpa %s933, 1

</llo_original>
